<compile_context>
chip_gen: v5e
topology: v5e:2x2
jax: 0.10.0
libtpu: 0.0.40
codegen_flags: <defaults>
</compile_context>

<pallas_src>
import functools

import jax
import jax.numpy as jnp
import numpy as np
from jax.experimental import pallas as pl
from jax.experimental.pallas import tpu as pltpu


def _round_up(x, m):
    return ((x + m - 1) // m) * m


def _pick_row_tile(hw):
    """Largest row tile that divides HW and leaves >=2 grid steps (falls back to HW)."""
    for cand in (512, 256, 128, 64, 32, 16, 8):
        if hw % cand == 0 and hw // cand >= 2:
            return cand
    return hw


def _moco_kernel(x_ref, wb_ref, bb_ref, wh_ref, bh_ref,
                 feat_ref, y_ref, acc_ref, *, hw):
    """One (batch b, row-tile t) grid step.

    x_ref   : (1, tile_hw, Cin)  bf16  channels-last pixels of batch b, tile t
    wb_ref  : (Cin, CencP)       bf16  synthetic backbone 1x1-conv weight (lane padded)
    bb_ref  : (1, CencP)         f32   backbone bias (lane padded)
    wh_ref  : (CencP, NP)        f32   fused [cam_ivt | cam_i | cam_v | cam_t] weight
    bh_ref  : (1, NP)            f32   fused head bias
    feat_ref: (1, 1, CencP)      f32   output (lane padded feat)
    y_ref   : (1, 1, NP)         f32   output (fused lane padded head logits)
    acc_ref : (1, CencP)         f32   scratch: running per-batch row sum of h
    """
    t = pl.program_id(1)

    @pl.when(t == 0)
    def _():
        acc_ref[...] = jnp.zeros_like(acc_ref)

    # Backbone 1x1 conv on this tile of pixels: bf16 operands, fp32 MXU accumulation.
    x = x_ref[0]                                                       # (tile_hw, Cin)
    h = jnp.dot(x, wb_ref[...], preferred_element_type=jnp.float32)    # (tile_hw, CencP)
    # Partial AdaptiveAvgPool2d(1): accumulate the row sum for this batch element.
    acc_ref[...] += jnp.sum(h, axis=0, keepdims=True)

    @pl.when(t == pl.num_programs(1) - 1)
    def _():
        # Finalize pool: mean_rows(x @ Wb) + bb == mean_rows(x @ Wb + bb)  (exact).
        feat = acc_ref[...] * (1.0 / hw) + bb_ref[...]                  # (1, CencP) f32
        feat_ref[0] = feat
        # Heads are linear 1x1 convs, so pool(head(h)) == head(pool(h)):
        # one fused lane-dense matmul replaces four full-resolution head convs + pools.
        y_ref[0] = jnp.dot(feat, wh_ref[...],
                           preferred_element_type=jnp.float32) + bh_ref[...]


def moco_forward(im_q, params):
    """im_q: (B, Cin, H, W) float32 (NCHW, like the PyTorch module)."""
    B, Cin, H, W = im_q.shape
    HW = H * W
    Cenc = params["wb"].shape[1]

    CencP = _round_up(Cenc, 128)
    n_heads = 100 + 6 + 10 + 15            # cam_ivt, cam_i, cam_v, cam_t
    NP = _round_up(n_heads, 128)

    # NCHW -> (B, HW, Cin) channels-last; bf16 operands for the backbone matmul.
    x = jnp.transpose(im_q, (0, 2, 3, 1)).reshape(B, HW, Cin).astype(jnp.bfloat16)

    # Pad backbone weight/bias to a 128-lane-dense Cenc (extra lanes stay exactly 0).
    wb = jnp.zeros((Cin, CencP), jnp.bfloat16).at[:, :Cenc].set(
        params["wb"].astype(jnp.bfloat16))
    bb = jnp.zeros((1, CencP), jnp.float32).at[:, :Cenc].set(params["bb"])

    # Fuse the four heads into one (CencP, NP) matrix (fp32: tiny, precision-preserving;
    # zero rows for padded Cenc lanes keep the result exact).
    wh = jnp.concatenate(
        [params["wivt"], params["wi"], params["wv"], params["wt"]], axis=1)   # (Cenc, 131)
    bh = jnp.concatenate(
        [params["bivt"], params["bi"], params["bv"], params["bt"]], axis=1)   # (1, 131)
    wh = jnp.zeros((CencP, NP), jnp.float32).at[:Cenc, :n_heads].set(wh)
    bh = jnp.zeros((1, NP), jnp.float32).at[:, :n_heads].set(bh)

    tile_hw = _pick_row_tile(HW)
    n_tiles = HW // tile_hw

    kernel = functools.partial(_moco_kernel, hw=HW)

    feat_full, y_full = pl.pallas_call(
        kernel,
        out_shape=(jax.ShapeDtypeStruct((B, 1, CencP), jnp.float32),
                   jax.ShapeDtypeStruct((B, 1, NP), jnp.float32)),
        grid_spec=pltpu.PrefetchScalarGridSpec(
            num_scalar_prefetch=0,
            grid=(B, n_tiles),
            in_specs=[
                pl.BlockSpec((1, tile_hw, Cin), lambda b, t: (b, t, 0)),
                pl.BlockSpec((Cin, CencP), lambda b, t: (0, 0)),
                pl.BlockSpec((1, CencP), lambda b, t: (0, 0)),
                pl.BlockSpec((CencP, NP), lambda b, t: (0, 0)),
                pl.BlockSpec((1, NP), lambda b, t: (0, 0)),
            ],
            out_specs=(
                pl.BlockSpec((1, 1, CencP), lambda b, t: (b, 0, 0)),
                pl.BlockSpec((1, 1, NP), lambda b, t: (b, 0, 0)),
            ),
            scratch_shapes=[pltpu.VMEM((1, CencP), jnp.float32)],
        ),
        compiler_params=pltpu.CompilerParams(
            dimension_semantics=("parallel", "arbitrary")),
    )(x, wb, bb, wh, bh)

    feat = feat_full[:, 0, :Cenc]
    y_all = y_full[:, 0, :]
    y = y_all[:, :100]
    y_i = y_all[:, 100:106]
    y_v = y_all[:, 106:116]
    y_t = y_all[:, 116:131]

    # PyTorch forward (im_k is None) returns:
    #   (0, 0, 0, [(feat, y), (feat, y_i), (feat, y_v), (feat, y_t)])
    return 0, 0, 0, [(feat, y), (feat, y_i), (feat, y_v), (feat, y_t)]


def moco_ref(im_q, params):
    """Pure-JAX fp32 reference of the same im_k=None path (for a sanity check)."""
    B, Cin, H, W = im_q.shape
    x = jnp.transpose(im_q, (0, 2, 3, 1)).reshape(B, H * W, Cin)
    h = jnp.einsum("bpc,ce->bpe", x, params["wb"]) + params["bb"]

    def pool_head(w, b):
        cam = jnp.einsum("bpe,eo->bpo", h, w) + b
        return jnp.mean(cam, axis=1)

    feat = jnp.mean(h, axis=1)
    y = pool_head(params["wivt"], params["bivt"])
    y_i = pool_head(params["wi"], params["bi"])
    y_v = pool_head(params["wv"], params["bv"])
    y_t = pool_head(params["wt"], params["bt"])
    return feat, y, y_i, y_v, y_t


def init_params(key, cin, cenc):
    """Deterministic synthetic parameters (shapes follow the module's __init__)."""
    ks = jax.random.split(key, 10)

    def lin(kw, kb, fan_in, fan_out):
        scale = 1.0 / jnp.sqrt(jnp.float32(fan_in))
        w = jax.random.normal(kw, (fan_in, fan_out), jnp.float32) * scale
        b = jax.random.normal(kb, (1, fan_out), jnp.float32) * scale
        return w, b

    wb, bb = lin(ks[0], ks[1], cin, cenc)      # synthetic backbone 1x1 conv
    wi, bi = lin(ks[2], ks[3], cenc, 6)        # cam_i
    wv, bv = lin(ks[4], ks[5], cenc, 10)       # cam_v
    wt, bt = lin(ks[6], ks[7], cenc, 15)       # cam_t
    wivt, bivt = lin(ks[8], ks[9], cenc, 100)  # cam_ivt
    return dict(wb=wb, bb=bb, wi=wi, bi=bi, wv=wv, bv=bv,
                wt=wt, bt=bt, wivt=wivt, bivt=bivt)


if __name__ == "__main__":
    B, Cin, H, W = 2, 4, 16, 16
    Cenc = 32  # encoder_q.num_channels

    key = jax.random.PRNGKey(0)
    k_x, k_p = jax.random.split(key)
    im_q = jax.random.normal(k_x, (B, Cin, H, W), jnp.float32)
    params = init_params(k_p, Cin, Cenc)

    _, _, _, outs = moco_forward(im_q, params)
    for feat, yy in outs:
        jax.block_until_ready(feat)
        jax.block_until_ready(yy)

    # sanity on shapes implied by the module
    assert outs[0][0].shape == (B, Cenc)
    assert outs[0][1].shape == (B, 100)
    assert outs[1][1].shape == (B, 6)
    assert outs[2][1].shape == (B, 10)
    assert outs[3][1].shape == (B, 15)

    # numerical sanity vs a pure-JAX fp32 reference (kernel backbone runs in bf16,
    # so a loose tolerance is expected and sufficient to catch structural bugs).
    rf, ry, ryi, ryv, ryt = moco_ref(im_q, params)
    for got, want in ((outs[0][0], rf), (outs[0][1], ry),
                      (outs[1][1], ryi), (outs[2][1], ryv), (outs[3][1], ryt)):
        assert float(jnp.max(jnp.abs(got - want))) < 0.1

    print("KERNEL_OK")
</pallas_src>

<mosaic_0001>
module attributes {stable_mosaic.version = 11 : i64} {
  func.func @_moco_kernel(%arg0: i32, %arg1: i32, %arg2: memref<1x128x4xbf16, #tpu.memory_space<vmem>>, %arg3: memref<4x128xbf16, #tpu.memory_space<vmem>>, %arg4: memref<1x128xf32, #tpu.memory_space<vmem>>, %arg5: memref<128x256xf32, #tpu.memory_space<vmem>>, %arg6: memref<1x256xf32, #tpu.memory_space<vmem>>, %arg7: memref<1x1x128xf32, #tpu.memory_space<vmem>>, %arg8: memref<1x1x256xf32, #tpu.memory_space<vmem>>, %arg9: memref<1x128xf32, #tpu.memory_space<vmem>>) attributes {dimension_semantics = [#tpu.dimension_semantics<parallel>, #tpu.dimension_semantics<arbitrary>], iteration_bounds = array<i64: 2, 2>, scalar_prefetch = 0 : i64, scratch_operands = 1 : i64, tpu.core_type = #tpu.core_type<tc>, window_params = [{transform_indices = @transform_0, window_bounds = array<i64: 1, 128, 4>}, {pipeline_mode = #tpu.pipeline_mode<synchronous>, transform_indices = @transform_1, window_bounds = array<i64: 4, 128>}, {pipeline_mode = #tpu.pipeline_mode<synchronous>, transform_indices = @transform_2, window_bounds = array<i64: 1, 128>}, {pipeline_mode = #tpu.pipeline_mode<synchronous>, transform_indices = @transform_3, window_bounds = array<i64: 128, 256>}, {pipeline_mode = #tpu.pipeline_mode<synchronous>, transform_indices = @transform_4, window_bounds = array<i64: 1, 256>}, {transform_indices = @transform_5, window_bounds = array<i64: 1, 1, 128>}, {transform_indices = @transform_6, window_bounds = array<i64: 1, 1, 256>}]} {
    %c0_i32 = arith.constant 0 : i32
    %0 = arith.cmpi eq, %arg1, %c0_i32 : i32
    %1 = arith.extui %0 : i1 to i32
    %c0_i32_0 = arith.constant 0 : i32
    %2 = arith.cmpi ne, %1, %c0_i32_0 : i32
    scf.if %2 {
      %cst_11 = arith.constant 0.000000e+00 : f32
      %15 = vector.broadcast %cst_11 : f32 to vector<1x128xf32>
      %c0_12 = arith.constant 0 : index
      %c0_13 = arith.constant 0 : index
      %16 = vector.load %arg9[%c0_12, %c0_13] : memref<1x128xf32, #tpu.memory_space<vmem>>, vector<1x128xf32>
      tpu.vector_store %arg9[%c0_12, %c0_13], %15 {strides = array<i32>} : memref<1x128xf32, #tpu.memory_space<vmem>>, vector<1x128xf32>,
    } else {
    }
    %c0 = arith.constant 0 : index
    %c0_1 = arith.constant 0 : index
    %c0_2 = arith.constant 0 : index
    %3 = vector.load %arg2[%c0, %c0_1, %c0_2] : memref<1x128x4xbf16, #tpu.memory_space<vmem>>, vector<1x128x4xbf16>
    %4 = vector.shape_cast %3 : vector<1x128x4xbf16> to vector<128x4xbf16>
    %c0_3 = arith.constant 0 : index
    %c0_4 = arith.constant 0 : index
    %5 = vector.load %arg3[%c0_3, %c0_4] : memref<4x128xbf16, #tpu.memory_space<vmem>>, vector<4x128xbf16>
    %cst = arith.constant dense<0.000000e+00> : vector<128x128xf32>
    %6 = tpu.matmul %4, %5, %cst {dimension_numbers = #tpu.dot_dimension_numbers<[1], [0], [0], [1], [0, 0, 1, 1], [], []>} : vector<128x4xbf16>, vector<4x128xbf16>, vector<128x128xf32> -> vector<128x128xf32>
    %c0_5 = arith.constant 0 : index
    %c0_6 = arith.constant 0 : index
    %7 = vector.load %arg9[%c0_5, %c0_6] : memref<1x128xf32, #tpu.memory_space<vmem>>, vector<1x128xf32>
    %cst_7 = arith.constant dense<0.000000e+00> : vector<128xf32>
    %8 = vector.multi_reduction <add>, %6, %cst_7 [0] : vector<128x128xf32> to vector<128xf32>
    %9 = vector.shape_cast %8 : vector<128xf32> to vector<1x128xf32>
    %10 = arith.addf %7, %9 : vector<1x128xf32>
    %c0_8 = arith.constant 0 : index
    %c0_9 = arith.constant 0 : index
    %11 = vector.load %arg9[%c0_8, %c0_9] : memref<1x128xf32, #tpu.memory_space<vmem>>, vector<1x128xf32>
    tpu.vector_store %arg9[%c0_8, %c0_9], %10 {strides = array<i32>} : memref<1x128xf32, #tpu.memory_space<vmem>>, vector<1x128xf32>,
    %c1_i32 = arith.constant 1 : i32
    %12 = arith.cmpi eq, %arg1, %c1_i32 : i32
    %13 = arith.extui %12 : i1 to i32
    %c0_i32_10 = arith.constant 0 : i32
    %14 = arith.cmpi ne, %13, %c0_i32_10 : i32
    scf.if %14 {
      %c0_11 = arith.constant 0 : index
      %c0_12 = arith.constant 0 : index
      %15 = vector.load %arg9[%c0_11, %c0_12] : memref<1x128xf32, #tpu.memory_space<vmem>>, vector<1x128xf32>
      %cst_13 = arith.constant 3.906250e-03 : f32
      %16 = vector.broadcast %cst_13 : f32 to vector<1x128xf32>
      %17 = arith.mulf %15, %16 : vector<1x128xf32>
      %c0_14 = arith.constant 0 : index
      %c0_15 = arith.constant 0 : index
      %18 = vector.load %arg4[%c0_14, %c0_15] : memref<1x128xf32, #tpu.memory_space<vmem>>, vector<1x128xf32>
      %19 = arith.addf %17, %18 : vector<1x128xf32>
      %c0_16 = arith.constant 0 : index
      %c0_17 = arith.constant 0 : index
      %c0_18 = arith.constant 0 : index
      %20 = vector.load %arg7[%c0_16, %c0_17, %c0_18] : memref<1x1x128xf32, #tpu.memory_space<vmem>>, vector<1x1x128xf32>
      %21 = vector.shape_cast %20 : vector<1x1x128xf32> to vector<1x128xf32>
      %22 = vector.shape_cast %19 : vector<1x128xf32> to vector<1x1x128xf32>
      tpu.vector_store %arg7[%c0_16, %c0_17, %c0_18], %22 {strides = array<i32>} : memref<1x1x128xf32, #tpu.memory_space<vmem>>, vector<1x1x128xf32>,
      %c0_19 = arith.constant 0 : index
      %c0_20 = arith.constant 0 : index
      %23 = vector.load %arg5[%c0_19, %c0_20] : memref<128x256xf32, #tpu.memory_space<vmem>>, vector<128x256xf32>
      %cst_21 = arith.constant dense<0.000000e+00> : vector<1x256xf32>
      %24 = tpu.matmul %19, %23, %cst_21 {dimension_numbers = #tpu.dot_dimension_numbers<[1], [0], [0], [1], [0, 0, 1, 1], [], []>} : vector<1x128xf32>, vector<128x256xf32>, vector<1x256xf32> -> vector<1x256xf32>
      %c0_22 = arith.constant 0 : index
      %c0_23 = arith.constant 0 : index
      %25 = vector.load %arg6[%c0_22, %c0_23] : memref<1x256xf32, #tpu.memory_space<vmem>>, vector<1x256xf32>
      %26 = arith.addf %24, %25 : vector<1x256xf32>
      %c0_24 = arith.constant 0 : index
      %c0_25 = arith.constant 0 : index
      %c0_26 = arith.constant 0 : index
      %27 = vector.load %arg8[%c0_24, %c0_25, %c0_26] : memref<1x1x256xf32, #tpu.memory_space<vmem>>, vector<1x1x256xf32>
      %28 = vector.shape_cast %27 : vector<1x1x256xf32> to vector<1x256xf32>
      %29 = vector.shape_cast %26 : vector<1x256xf32> to vector<1x1x256xf32>
      tpu.vector_store %arg8[%c0_24, %c0_25, %c0_26], %29 {strides = array<i32>} : memref<1x1x256xf32, #tpu.memory_space<vmem>>, vector<1x1x256xf32>,
    } else {
    }
    return
  }
  func.func @transform_0(%arg0: i32, %arg1: i32) -> (i32, i32, i32) {
    %c0_i32 = arith.constant 0 : i32
    %c0_i32_0 = arith.constant 0 : i32
    return %arg0, %arg1, %c0_i32 : i32, i32, i32
  }
  func.func @transform_1(%arg0: i32, %arg1: i32) -> (i32, i32) {
    %c0_i32 = arith.constant 0 : i32
    %c0_i32_0 = arith.constant 0 : i32
    %c0_i32_1 = arith.constant 0 : i32
    return %c0_i32, %c0_i32_0 : i32, i32
  }
  func.func @transform_2(%arg0: i32, %arg1: i32) -> (i32, i32) {
    %c0_i32 = arith.constant 0 : i32
    %c0_i32_0 = arith.constant 0 : i32
    %c0_i32_1 = arith.constant 0 : i32
    return %c0_i32, %c0_i32_0 : i32, i32
  }
  func.func @transform_3(%arg0: i32, %arg1: i32) -> (i32, i32) {
    %c0_i32 = arith.constant 0 : i32
    %c0_i32_0 = arith.constant 0 : i32
    %c0_i32_1 = arith.constant 0 : i32
    return %c0_i32, %c0_i32_0 : i32, i32
  }
  func.func @transform_4(%arg0: i32, %arg1: i32) -> (i32, i32) {
    %c0_i32 = arith.constant 0 : i32
    %c0_i32_0 = arith.constant 0 : i32
    %c0_i32_1 = arith.constant 0 : i32
    return %c0_i32, %c0_i32_0 : i32, i32
  }
  func.func @transform_5(%arg0: i32, %arg1: i32) -> (i32, i32, i32) {
    %c0_i32 = arith.constant 0 : i32
    %c0_i32_0 = arith.constant 0 : i32
    %c0_i32_1 = arith.constant 0 : i32
    return %arg0, %c0_i32, %c0_i32_0 : i32, i32, i32
  }
  func.func @transform_6(%arg0: i32, %arg1: i32) -> (i32, i32, i32) {
    %c0_i32 = arith.constant 0 : i32
    %c0_i32_0 = arith.constant 0 : i32
    %c0_i32_1 = arith.constant 0 : i32
    return %arg0, %c0_i32, %c0_i32_0 : i32, i32, i32
  }
}

</mosaic_0001>

<llo_original>
// kernel: tpu_custom_call.1
$region0: #{tpu_custom_call.1}
  #allocation0 [shape = 'u32[]', space=smem, size = 0x4, offset = 0x4, fixed_abs, tag = 'smem constant byte address 0x4 - core index']
  #allocation1 [shape = 'u32[72,128]{1,0:T(1,128)}', space=vmem, size = 0x9000, scoped, tag = 'internal scratch']
  #allocation2 [shape = 'f32[1,128]{1,0:T(1,128)}', space=vmem, size = 0x200, scoped, tag = 'scratch operand']
  %s0 = inlined_call_operand.vmem [shape: bf16[2,256,4], index: 0, kind: input, shape index: {}]
  %s1 = inlined_call_operand.vmem [shape: bf16[4,128], index: 1, kind: input, shape index: {}]
  %s2 = inlined_call_operand.vmem [shape: f32[1,128], index: 2, kind: input, shape index: {}]
  %s3 = inlined_call_operand.vmem [shape: f32[128,256], index: 3, kind: input, shape index: {}]
  %s4 = inlined_call_operand.vmem [shape: f32[1,256], index: 4, kind: input, shape index: {}]
  %s5 = inlined_call_operand.hbm [shape: f32[2,1,128], index: 5, kind: output, shape index: {0}]
  %s6 = inlined_call_operand.hbm [shape: f32[2,1,256], index: 6, kind: output, shape index: {1}]
  %7 = xla_tuple %s5, %s6
  %s8 = sld [smem:[#allocation0]]
  $region69: #{tpu_custom_call.1} parent=0
    _
  %s10 = ssub.s32 1, %s8
  %s11 = scalar_select 0, %s10, %s8
  $region1: #{tpu_custom_call.1} parent=0
    #allocation3 [shape = 'u8[1024]{0}', space=vmem, size = 0x400, scoped, tag = 'output window, operand 0']
    #allocation4 [shape = 's32[2]{0}', space=sflag, size = 0x8, scoped, tag = 'scoped memory for tpu_custom_call.1']
    #allocation5 [shape = 'u8[2048]{0}', space=vmem, size = 0x800, scoped, tag = 'output window, operand 1']
    #allocation6 [shape = 's32[2]{0}', space=sflag, size = 0x8, scoped, tag = 'scoped memory for tpu_custom_call.1']
    %12 = vsyncpa [#allocation4], 0
    %s13 = scalar_lea.sflag [#allocation4], 1
    %14 = vsyncpa %s13, 0
    %15 = vsyncpa [#allocation6], 0
    %s16 = scalar_lea.sflag [#allocation6], 1
    %17 = vsyncpa %s16, 0
    loop: start=0, step=1, limit=6
    $region2: #{tpu_custom_call.1} parent=1 // loop_pre_header
      _
    $region3: #{tpu_custom_call.1} parent=1 // loop_header
      %s19 = sphi 0, %s23
      %p20 = scmp.ge.s32.totalorder %s19, 6
      %s26 = sphi 0, %s38
      %s27 = sphi 0, %s34
      %s28 = sphi 0, %s26
      %s29 = sphi 0, %s27
      %s30 = sphi 0, %s28
      %s31 = sphi 0, %s29
      %s43 = sphi 0, %s45
      %s46 = sphi 0, %s43
      %s47 = sphi 0, %s46
      %s63 = sphi 0, %s47
      %s67 = sphi 0, %s67
      %s69 = sphi 0, %s67
      %s70 = sphi 0, %s69
      %s84 = sphi 0, %s70
      %s88 = sphi 0, %s88
      %s90 = sphi 0, %s88
      %s91 = sphi 0, %s90
      %s105 = sphi 0, %s91
      %s109 = sphi 0, %s109
      %s111 = sphi 0, %s109
      %s112 = sphi 0, %s111
      %s126 = sphi 0, %s112
      %s130 = sphi 0, %s130
      %s132 = sphi 0, %s130
      %s133 = sphi 0, %s132
      %s147 = sphi 0, %s133
      %s153 = sphi 0, %s155
      %s156 = sphi 0, %s153
      %s157 = sphi 0, %s156
      %s173 = sphi 0, %s157
      %s179 = sphi 0, %s181
      %s182 = sphi 0, %s179
      %s183 = sphi 0, %s182
      %s199 = sphi 0, %s183
    $region4: #{tpu_custom_call.1} parent=1 // loop_header_branch
      %22 = sbr.rel (%p20) target = $region8
    $region5: #{tpu_custom_call.1} parent=1 // loop_body
      %s24 = ssub.s32 %s19, 1
      %s25 = ssub.s32 %s19, 2
      %s32 = sadd.s32 1, %s27
      %p33 = scmp.ge.s32.totalorder %s32, 2
      %s34 = scalar_select %p33, 0, %s32
      %s35 = sadd.s32 1, %s26
      %s36 = scalar_select %p33, %s35, %s26
      %p37 = scmp.ge.s32.totalorder %s36, 2
      %s38 = scalar_select %p37, 0, %s36
      %s39 = ssub.s32 %s26, %s38
      %s40 = ssub.s32 %s27, %s34
      %s41 = sor.u32 %s39, %s40
      %p42 = scmp.eq.s32.totalorder %s41, 0
      %s44 = sadd.s32 %s43, 1
      %s45 = scalar_select %p42, %s43, %s44
      %p48 = pneg %p42
      %p49 = scmp.eq.s32.totalorder %s19, 3
      %p50 = por %p48, %p49
      %p51 = scmp.ne.s32.totalorder %s43, %s46
      %p52 = scmp.eq.s32.totalorder %s19, 0
      %p53 = por %p51, %p52
      %p54 = scmp.ne.s32.totalorder %s43, %s46
      %p55 = scmp.eq.s32.totalorder %s24, 3
      %p56 = por %p54, %p55
      %p57 = scmp.ne.s32.totalorder %s46, %s47
      %p58 = scmp.eq.s32.totalorder %s24, 0
      %p59 = por %p57, %p58
      %p60 = scmp.ne.s32.totalorder %s46, %s47
      %p61 = scmp.eq.s32.totalorder %s25, 3
      %p62 = por %p60, %p61
      %p64 = scmp.ne.s32.totalorder %s47, %s63
      %p65 = scmp.eq.s32.totalorder %s25, 0
      %p66 = por %p64, %p65
      %s68 = sadd.s32 %s67, 1
      %p71 = scmp.eq.s32.totalorder %s19, 3
      %p72 = scmp.ne.s32.totalorder %s67, %s69
      %p73 = scmp.eq.s32.totalorder %s19, 0
      %p74 = por %p72, %p73
      %p75 = scmp.ne.s32.totalorder %s67, %s69
      %p76 = scmp.eq.s32.totalorder %s24, 3
      %p77 = por %p75, %p76
      %p78 = scmp.ne.s32.totalorder %s69, %s70
      %p79 = scmp.eq.s32.totalorder %s24, 0
      %p80 = por %p78, %p79
      %p81 = scmp.ne.s32.totalorder %s69, %s70
      %p82 = scmp.eq.s32.totalorder %s25, 3
      %p83 = por %p81, %p82
      %p85 = scmp.ne.s32.totalorder %s70, %s84
      %p86 = scmp.eq.s32.totalorder %s25, 0
      %p87 = por %p85, %p86
      %s89 = sadd.s32 %s88, 1
      %p92 = scmp.eq.s32.totalorder %s19, 3
      %p93 = scmp.ne.s32.totalorder %s88, %s90
      %p94 = scmp.eq.s32.totalorder %s19, 0
      %p95 = por %p93, %p94
      %p96 = scmp.ne.s32.totalorder %s88, %s90
      %p97 = scmp.eq.s32.totalorder %s24, 3
      %p98 = por %p96, %p97
      %p99 = scmp.ne.s32.totalorder %s90, %s91
      %p100 = scmp.eq.s32.totalorder %s24, 0
      %p101 = por %p99, %p100
      %p102 = scmp.ne.s32.totalorder %s90, %s91
      %p103 = scmp.eq.s32.totalorder %s25, 3
      %p104 = por %p102, %p103
      %p106 = scmp.ne.s32.totalorder %s91, %s105
      %p107 = scmp.eq.s32.totalorder %s25, 0
      %p108 = por %p106, %p107
      %s110 = sadd.s32 %s109, 1
      %p113 = scmp.eq.s32.totalorder %s19, 3
      %p114 = scmp.ne.s32.totalorder %s109, %s111
      %p115 = scmp.eq.s32.totalorder %s19, 0
      %p116 = por %p114, %p115
      %p117 = scmp.ne.s32.totalorder %s109, %s111
      %p118 = scmp.eq.s32.totalorder %s24, 3
      %p119 = por %p117, %p118
      %p120 = scmp.ne.s32.totalorder %s111, %s112
      %p121 = scmp.eq.s32.totalorder %s24, 0
      %p122 = por %p120, %p121
      %p123 = scmp.ne.s32.totalorder %s111, %s112
      %p124 = scmp.eq.s32.totalorder %s25, 3
      %p125 = por %p123, %p124
      %p127 = scmp.ne.s32.totalorder %s112, %s126
      %p128 = scmp.eq.s32.totalorder %s25, 0
      %p129 = por %p127, %p128
      %s131 = sadd.s32 %s130, 1
      %p134 = scmp.eq.s32.totalorder %s19, 3
      %p135 = scmp.ne.s32.totalorder %s130, %s132
      %p136 = scmp.eq.s32.totalorder %s19, 0
      %p137 = por %p135, %p136
      %p138 = scmp.ne.s32.totalorder %s130, %s132
      %p139 = scmp.eq.s32.totalorder %s24, 3
      %p140 = por %p138, %p139
      %p141 = scmp.ne.s32.totalorder %s132, %s133
      %p142 = scmp.eq.s32.totalorder %s24, 0
      %p143 = por %p141, %p142
      %p144 = scmp.ne.s32.totalorder %s132, %s133
      %p145 = scmp.eq.s32.totalorder %s25, 3
      %p146 = por %p144, %p145
      %p148 = scmp.ne.s32.totalorder %s133, %s147
      %p149 = scmp.eq.s32.totalorder %s25, 0
      %p150 = por %p148, %p149
      %s151 = ssub.s32 %s26, %s38
      %p152 = scmp.eq.s32.totalorder %s151, 0
      %s154 = sadd.s32 %s153, 1
      %s155 = scalar_select %p152, %s153, %s154
      %p158 = pneg %p152
      %p159 = scmp.eq.s32.totalorder %s19, 3
      %p160 = por %p158, %p159
      %p161 = scmp.ne.s32.totalorder %s153, %s156
      %p162 = scmp.eq.s32.totalorder %s19, 0
      %p163 = por %p161, %p162
      %p164 = scmp.ne.s32.totalorder %s153, %s156
      %p165 = scmp.eq.s32.totalorder %s24, 3
      %p166 = por %p164, %p165
      %p167 = scmp.ne.s32.totalorder %s156, %s157
      %p168 = scmp.eq.s32.totalorder %s24, 0
      %p169 = por %p167, %p168
      %p170 = scmp.ne.s32.totalorder %s156, %s157
      %p171 = scmp.eq.s32.totalorder %s25, 3
      %p172 = por %p170, %p171
      %p174 = scmp.ne.s32.totalorder %s157, %s173
      %p175 = scmp.eq.s32.totalorder %s25, 0
      %p176 = por %p174, %p175
      %s177 = ssub.s32 %s26, %s38
      %p178 = scmp.eq.s32.totalorder %s177, 0
      %s180 = sadd.s32 %s179, 1
      %s181 = scalar_select %p178, %s179, %s180
      %p184 = pneg %p178
      %p185 = scmp.eq.s32.totalorder %s19, 3
      %p186 = por %p184, %p185
      %p187 = scmp.ne.s32.totalorder %s179, %s182
      %p188 = scmp.eq.s32.totalorder %s19, 0
      %p189 = por %p187, %p188
      %p190 = scmp.ne.s32.totalorder %s179, %s182
      %p191 = scmp.eq.s32.totalorder %s24, 3
      %p192 = por %p190, %p191
      %p193 = scmp.ne.s32.totalorder %s182, %s183
      %p194 = scmp.eq.s32.totalorder %s24, 0
      %p195 = por %p193, %p194
      %p196 = scmp.ne.s32.totalorder %s182, %s183
      %p197 = scmp.eq.s32.totalorder %s25, 3
      %p198 = por %p196, %p197
      %p200 = scmp.ne.s32.totalorder %s183, %s199
      %p201 = scmp.eq.s32.totalorder %s25, 0
      %p202 = por %p200, %p201
      %p203 = scmp.le.s32.totalorder 1, %s19
      %p204 = scmp.lt.s32.totalorder %s19, 5
      %p205 = pnand %p203, %p204
      %p206 = pneg %p205
      // Predicated region
      $region9: #{tpu_custom_call.1} parent=5 // pred_check
        _
      $region10: #{tpu_custom_call.1} parent=5 // pred_check_branch
        %208 = sbr.rel (%p205) target = $region12
      $region11: #{tpu_custom_call.1} parent=5 // pred_region
        %s209 = ssub.s32 %s19, 1
        // Predicated region
        $region13: #{tpu_custom_call.1} parent=11 // pred_check
          %p210 = pneg %p80
        $region14: #{tpu_custom_call.1} parent=11 // pred_check_branch
          %212 = sbr.rel (%p210) target = $region16
        $region15: #{tpu_custom_call.1} parent=11 // pred_region
          _
        $region16: #{tpu_custom_call.1} parent=11 // pred_fallthru
          _
        // Predicated region
        $region17: #{tpu_custom_call.1} parent=11 // pred_check
          %p213 = pneg %p101
        $region18: #{tpu_custom_call.1} parent=11 // pred_check_branch
          %215 = sbr.rel (%p213) target = $region20
        $region19: #{tpu_custom_call.1} parent=11 // pred_region
          _
        $region20: #{tpu_custom_call.1} parent=11 // pred_fallthru
          _
        // Predicated region
        $region21: #{tpu_custom_call.1} parent=11 // pred_check
          %p216 = pneg %p122
        $region22: #{tpu_custom_call.1} parent=11 // pred_check_branch
          %218 = sbr.rel (%p216) target = $region24
        $region23: #{tpu_custom_call.1} parent=11 // pred_region
          _
        $region24: #{tpu_custom_call.1} parent=11 // pred_fallthru
          _
        // Predicated region
        $region25: #{tpu_custom_call.1} parent=11 // pred_check
          %p219 = pneg %p143
        $region26: #{tpu_custom_call.1} parent=11 // pred_check_branch
          %221 = sbr.rel (%p219) target = $region28
        $region27: #{tpu_custom_call.1} parent=11 // pred_region
          _
        $region28: #{tpu_custom_call.1} parent=11 // pred_fallthru
          _
      $region12: #{tpu_custom_call.1} parent=5 // pred_fallthru
        _
      %p222 = scmp.lt.s32.totalorder %s19, 4
      // Predicated region
      $region29: #{tpu_custom_call.1} parent=5 // pred_check
        %p223 = pneg %p222
      $region30: #{tpu_custom_call.1} parent=5 // pred_check_branch
        %225 = sbr.rel (%p223) target = $region32
      $region31: #{tpu_custom_call.1} parent=5 // pred_region
        // Predicated region
        $region33: #{tpu_custom_call.1} parent=31 // pred_check
          %p226 = pneg %p53
        $region34: #{tpu_custom_call.1} parent=31 // pred_check_branch
          %228 = sbr.rel (%p226) target = $region36
        $region35: #{tpu_custom_call.1} parent=31 // pred_region
          %s229 = smul.u32 16, %s27
          %p230 = scmp.lt.s32.totalorder %s26, 1
          %s231 = scalar_select %p230, %s26, 1
          %p232 = scmp.lt.s32.totalorder %s229, 31
          %s233 = scalar_select %p232, %s229, 31
          %s234 = smul.addr %s231, 32
          %s235 = sadd.s32 %s233, %s234
          %s236 = smul.addr %s235, 4
          %s237 = scalar_lea.vmem %s0, %s236
          %s238 = smul.u32 16, %s27
        $region36: #{tpu_custom_call.1} parent=31 // pred_fallthru
          _
      $region32: #{tpu_custom_call.1} parent=5 // pred_fallthru
        _
      %p239 = scmp.le.s32.totalorder 1, %s19
      %p240 = scmp.lt.s32.totalorder %s19, 5
      %p241 = pnand %p239, %p240
      %p242 = pneg %p241
      // Predicated region
      $region37: #{tpu_custom_call.1} parent=5 // pred_check
        _
      $region38: #{tpu_custom_call.1} parent=5 // pred_check_branch
        %244 = sbr.rel (%p241) target = $region40
      $region39: #{tpu_custom_call.1} parent=5 // pred_region
        %s245 = ssub.s32 %s19, 1
        %s246 = smul.u32 16, %s29
        %p247 = scmp.lt.s32.totalorder %s28, 1
        %s248 = scalar_select %p247, %s28, 1
        %p249 = scmp.lt.s32.totalorder %s246, 31
        %s250 = scalar_select %p249, %s246, 31
        %s251 = smul.addr %s248, 32
        %s252 = sadd.s32 %s250, %s251
        %s253 = smul.addr %s252, 4
        %s254 = scalar_lea.vmem %s0, %s253
        %p255 = pneg %p59
        %p256 = pneg %p56
        %p257 = pneg %p80
        %p258 = pneg %p77
        %p259 = pneg %p101
        %p260 = pneg %p98
        %p261 = pneg %p122
        %p262 = pneg %p119
        %p263 = pneg %p143
        %p264 = pneg %p140
        %p265 = pneg %p169
        %p266 = pneg %p166
        %s267 = sand.u32 %s156, 1
        %s268 = scalar_lea.sflag [#allocation4], %s267
        %s269 = sand.u32 %s156, 1
        %s270 = scalar_lea.vmem [#allocation3], %s269
        %p271 = pneg %p195
        %p272 = pneg %p192
        %s273 = sand.u32 %s182, 1
        %s274 = scalar_lea.sflag [#allocation6], %s273
        %s275 = sand.u32 %s182, 1
        %s276 = smul.addr %s275, 2
        %s277 = scalar_lea.vmem [#allocation5], %s276
        %s278 = smul.u32 16, %s29
        %p279 = scmp.lt.s32.totalorder %s28, 1
        %s280 = scalar_select %p279, %s28, 1
        %p281 = scmp.lt.s32.totalorder %s278, 31
        %s282 = scalar_select %p281, %s278, 31
        %s283 = smul.addr %s280, 32
        %s284 = sadd.s32 %s282, %s283
        %s285 = smul.addr %s284, 4
        %s286 = scalar_lea.vmem %s0, %s285
        %s287 = smul.u32 16, %s29
        %p289 = scmp.eq.s32.totalorder %s29, 0
        // Predicated region
        $region41: #{tpu_custom_call.1} parent=39 // pred_check
          %p290 = pneg %p289
        $region42: #{tpu_custom_call.1} parent=39 // pred_check_branch
          %292 = sbr.rel (%p290) target = $region44
        $region43: #{tpu_custom_call.1} parent=39 // pred_region
          %293 = vst [vmem:[#allocation2] sm:$0x1] 0.0
        $region44: #{tpu_custom_call.1} parent=39 // pred_fallthru
          _
        %v294 = vld [vmem:[%s286] sm:$0xf]
        %v295 = vld [vmem:[%s286 + $0x4] sm:$0xf]
        %v296 = vld [vmem:[%s286 + $0x8] sm:$0xf]
        %v297 = vld [vmem:[%s286 + $0xc] sm:$0xf]
        %v298 = vld [vmem:[%s286 + $0x10] sm:$0xf]
        %v299 = vld [vmem:[%s286 + $0x14] sm:$0xf]
        %v300 = vld [vmem:[%s286 + $0x18] sm:$0xf]
        %v301 = vld [vmem:[%s286 + $0x1c] sm:$0xf]
        %v302 = vld [vmem:[%s286 + $0x20] sm:$0xf]
        %v303 = vld [vmem:[%s286 + $0x24] sm:$0xf]
        %v304 = vld [vmem:[%s286 + $0x28] sm:$0xf]
        %v305 = vld [vmem:[%s286 + $0x2c] sm:$0xf]
        %v306 = vld [vmem:[%s286 + $0x30] sm:$0xf]
        %v307 = vld [vmem:[%s286 + $0x34] sm:$0xf]
        %v308 = vld [vmem:[%s286 + $0x38] sm:$0xf]
        %v309 = vld [vmem:[%s286 + $0x3c] sm:$0xf]
        %v310 = vld [vmem:[%s1] sm:$0x3]
        %v327 = vunpack.c.l.b16 %v294
        %v328 = vunpack.c.l.b16 %v295
        %v329 = vunpack.c.l.b16 %v296
        %v330 = vunpack.c.l.b16 %v297
        %v331 = vunpack.c.l.b16 %v298
        %v332 = vunpack.c.l.b16 %v299
        %v333 = vunpack.c.l.b16 %v300
        %v334 = vunpack.c.l.b16 %v301
        %v335 = vunpack.c.l.b16 %v302
        %v336 = vunpack.c.l.b16 %v303
        %v337 = vunpack.c.l.b16 %v304
        %v338 = vunpack.c.l.b16 %v305
        %v339 = vunpack.c.l.b16 %v306
        %v340 = vunpack.c.l.b16 %v307
        %v341 = vunpack.c.l.b16 %v308
        %v342 = vunpack.c.l.b16 %v309
        %v343 = vpack.c.b16 %v328, %v327
        %v344 = vpack.c.b16 %v330, %v329
        %v345 = vpack.c.b16 %v332, %v331
        %v346 = vpack.c.b16 %v334, %v333
        %v347 = vpack.c.b16 %v336, %v335
        %v348 = vpack.c.b16 %v338, %v337
        %v349 = vpack.c.b16 %v340, %v339
        %v350 = vpack.c.b16 %v342, %v341
        %vm351 = vcmask 31744
        %v353 = vsel %vm351, %v343, 0
        %v356 = vsel %vm351, %v344, 0
        %v359 = vsel %vm351, %v345, 0
        %v362 = vsel %vm351, %v346, 0
        %v365 = vsel %vm351, %v347, 0
        %v368 = vsel %vm351, %v348, 0
        %v371 = vsel %vm351, %v349, 0
        %v374 = vsel %vm351, %v350, 0
        %vm376 = vcmask 1041408
        %v378 = vsel %vm376, %v310, 0
        %380 = vmatpush.bf16.msra.mxu0 0
        %381 = vmatpush.bf16.msra.mxu0 0
        %382 = vmatpush.bf16.msra.mxu0 0
        %383 = vmatpush.bf16.msra.mxu0 0
        %384 = vmatpush.bf16.msra.mxu0 0
        %385 = vmatpush.bf16.msra.mxu0 0
        %386 = vmatpush.bf16.msra.mxu0 0
        %387 = vmatpush.bf16.msra.mxu0 %v378
        %388 = vmatmul.bf16.gmra.mxu0 %v353
        %v389 = vpop.f32.mrf.mxu0
        %v390 = vadd.f32 0.0, %v389
        %v391 = vpop.f32.mrf.mxu0
        %v392 = vadd.f32 0.0, %v391
        %393 = vmatmul.bf16.gmra.mxu0 %v356
        %v394 = vpop.f32.mrf.mxu0
        %v395 = vadd.f32 0.0, %v394
        %v396 = vpop.f32.mrf.mxu0
        %v397 = vadd.f32 0.0, %v396
        %398 = vmatmul.bf16.gmra.mxu0 %v359
        %v399 = vpop.f32.mrf.mxu0
        %v400 = vadd.f32 0.0, %v399
        %v401 = vpop.f32.mrf.mxu0
        %v402 = vadd.f32 0.0, %v401
        %403 = vmatmul.bf16.gmra.mxu0 %v362
        %v404 = vpop.f32.mrf.mxu0
        %v405 = vadd.f32 0.0, %v404
        %v406 = vpop.f32.mrf.mxu0
        %v407 = vadd.f32 0.0, %v406
        %408 = vmatmul.bf16.gmra.mxu0 %v365
        %v409 = vpop.f32.mrf.mxu0
        %v410 = vadd.f32 0.0, %v409
        %v411 = vpop.f32.mrf.mxu0
        %v412 = vadd.f32 0.0, %v411
        %413 = vmatmul.bf16.gmra.mxu0 %v368
        %v414 = vpop.f32.mrf.mxu0
        %v415 = vadd.f32 0.0, %v414
        %v416 = vpop.f32.mrf.mxu0
        %v417 = vadd.f32 0.0, %v416
        %418 = vmatmul.bf16.gmra.mxu0 %v371
        %v419 = vpop.f32.mrf.mxu0
        %v420 = vadd.f32 0.0, %v419
        %v421 = vpop.f32.mrf.mxu0
        %v422 = vadd.f32 0.0, %v421
        %423 = vmatmul.bf16.gmra.mxu0 %v374
        %v424 = vpop.f32.mrf.mxu0
        %v425 = vadd.f32 0.0, %v424
        %v426 = vpop.f32.mrf.mxu0
        %v427 = vadd.f32 0.0, %v426
        %428 = vdwg.mxu0
        %v429 = vld [vmem:[#allocation2] sm:$0x1]
        %v430 = vadd.f32 %v390, %v392
        %v431 = vadd.f32 %v430, %v395
        %v432 = vadd.f32 %v431, %v397
        %v433 = vadd.f32 %v432, %v400
        %v434 = vadd.f32 %v433, %v402
        %v435 = vadd.f32 %v434, %v405
        %v436 = vadd.f32 %v435, %v407
        %v437 = vadd.f32 %v436, %v410
        %v438 = vadd.f32 %v437, %v412
        %v439 = vadd.f32 %v438, %v415
        %v440 = vadd.f32 %v439, %v417
        %v441 = vadd.f32 %v440, %v420
        %v442 = vadd.f32 %v441, %v422
        %v443 = vadd.f32 %v442, %v425
        %v444 = vadd.f32 %v443, %v427
        %v445 = vrot.slane %v444, 4
        %v446 = vadd.f32 %v444, %v445
        %v447 = vrot.slane %v446, 2
        %v448 = vadd.f32 %v446, %v447
        %v449 = vrot.slane %v448, 1
        %v450 = vadd.f32 %v448, %v449
        %v451 = vadd.f32 %v429, %v450
        %452 = vst [vmem:[#allocation2] sm:$0x1] %v451
        %p453 = scmp.eq.s32.totalorder %s29, 1
        // Predicated region
        $region45: #{tpu_custom_call.1} parent=39 // pred_check
          %p454 = pneg %p453
        $region46: #{tpu_custom_call.1} parent=39 // pred_check_branch
          %456 = sbr.rel (%p454) target = $region48
        $region47: #{tpu_custom_call.1} parent=39 // pred_region
          %v457 = vld [vmem:[#allocation2] sm:$0x1]
          %v458 = vmul.f32 %v457, 0.00390625
          %v459 = vld [vmem:[%s2] sm:$0x1]
          %v460 = vadd.f32 %v458, %v459
          %461 = vst [vmem:[%s270] sm:$0x1] %v460
          %v462 = vld [vmem:[%s3] sm:$0xff]
          %v463 = vld [vmem:[%s3 + $0x8] sm:$0xff]
          %v464 = vld [vmem:[%s3 + $0x10] sm:$0xff]
          %v465 = vld [vmem:[%s3 + $0x18] sm:$0xff]
          %v466 = vld [vmem:[%s3 + $0x20] sm:$0xff]
          %v467 = vld [vmem:[%s3 + $0x28] sm:$0xff]
          %v468 = vld [vmem:[%s3 + $0x30] sm:$0xff]
          %v469 = vld [vmem:[%s3 + $0x38] sm:$0xff]
          %v470 = vld [vmem:[%s3 + $0x40] sm:$0xff]
          %v471 = vld [vmem:[%s3 + $0x48] sm:$0xff]
          %v472 = vld [vmem:[%s3 + $0x50] sm:$0xff]
          %v473 = vld [vmem:[%s3 + $0x58] sm:$0xff]
          %v474 = vld [vmem:[%s3 + $0x60] sm:$0xff]
          %v475 = vld [vmem:[%s3 + $0x68] sm:$0xff]
          %v476 = vld [vmem:[%s3 + $0x70] sm:$0xff]
          %v477 = vld [vmem:[%s3 + $0x78] sm:$0xff]
          %v478 = vld [vmem:[%s3 + $0x80] sm:$0xff]
          %v479 = vld [vmem:[%s3 + $0x88] sm:$0xff]
          %v480 = vld [vmem:[%s3 + $0x90] sm:$0xff]
          %v481 = vld [vmem:[%s3 + $0x98] sm:$0xff]
          %v482 = vld [vmem:[%s3 + $0xa0] sm:$0xff]
          %v483 = vld [vmem:[%s3 + $0xa8] sm:$0xff]
          %v484 = vld [vmem:[%s3 + $0xb0] sm:$0xff]
          %v485 = vld [vmem:[%s3 + $0xb8] sm:$0xff]
          %v486 = vld [vmem:[%s3 + $0xc0] sm:$0xff]
          %v487 = vld [vmem:[%s3 + $0xc8] sm:$0xff]
          %v488 = vld [vmem:[%s3 + $0xd0] sm:$0xff]
          %v489 = vld [vmem:[%s3 + $0xd8] sm:$0xff]
          %v490 = vld [vmem:[%s3 + $0xe0] sm:$0xff]
          %v491 = vld [vmem:[%s3 + $0xe8] sm:$0xff]
          %v492 = vld [vmem:[%s3 + $0xf0] sm:$0xff]
          %v493 = vld [vmem:[%s3 + $0xf8] sm:$0xff]
          %v494 = vld [vmem:[%s4] sm:$0x3]
          %v496 = vperm.slane %v494, 0
          %v497 = vperm.slane %v494, 1
          %500 = vmatpush.msra.mxu0 %v492
          %501 = vmatpush.msra.mxu0 %v490
          %502 = vmatpush.msra.mxu0 %v488
          %503 = vmatpush.msra.mxu0 %v486
          %504 = vmatpush.msra.mxu0 %v484
          %505 = vmatpush.msra.mxu0 %v482
          %506 = vmatpush.msra.mxu0 %v480
          %507 = vmatpush.msra.mxu0 %v478
          %508 = vmatpush.msra.mxu0 %v476
          %509 = vmatpush.msra.mxu0 %v474
          %510 = vmatpush.msra.mxu0 %v472
          %511 = vmatpush.msra.mxu0 %v470
          %512 = vmatpush.msra.mxu0 %v468
          %513 = vmatpush.msra.mxu0 %v466
          %514 = vmatpush.msra.mxu0 %v464
          %515 = vmatpush.msra.mxu0 %v462
          %516 = vmatmul.f32.gmra.mxu0 %v460
          %v517 = vpop.f32.mrf.mxu0
          %v518 = vadd.f32 %v496, %v517
          %519 = vdwg.mxu0
          %520 = vmatpush.msra.mxu0 %v493
          %521 = vmatpush.msra.mxu0 %v491
          %522 = vmatpush.msra.mxu0 %v489
          %523 = vmatpush.msra.mxu0 %v487
          %524 = vmatpush.msra.mxu0 %v485
          %525 = vmatpush.msra.mxu0 %v483
          %526 = vmatpush.msra.mxu0 %v481
          %527 = vmatpush.msra.mxu0 %v479
          %528 = vmatpush.msra.mxu0 %v477
          %529 = vmatpush.msra.mxu0 %v475
          %530 = vmatpush.msra.mxu0 %v473
          %531 = vmatpush.msra.mxu0 %v471
          %532 = vmatpush.msra.mxu0 %v469
          %533 = vmatpush.msra.mxu0 %v467
          %534 = vmatpush.msra.mxu0 %v465
          %535 = vmatpush.msra.mxu0 %v463
          %536 = vmatmul.f32.gmra.mxu0 %v460
          %v537 = vpop.f32.mrf.mxu0
          %v538 = vadd.f32 %v497, %v537
          %539 = vdwg.mxu0
          %v542 = vrot.slane %v538, 7
          %vm543 = vcmask 1040384
          %v544 = vsel %vm543, %v518, %v542
          %v546 = vlaneseq
          %vm547 = vcmp.ge.s32.totalorder %v546, 0
          %vm548 = vcmp.lt.s32.totalorder %v546, 256
          %vm549 = vmand %vm547, %vm548
          %550 = vst.msk [vmem:[%s277] sm:$0x3] %vm549, %v544
        $region48: #{tpu_custom_call.1} parent=39 // pred_fallthru
          _
        %s551 = sand.u32 %s156, 1
        %s552 = scalar_lea.sflag [#allocation4], %s551
        %s553 = sand.u32 %s156, 1
        %s554 = scalar_lea.vmem [#allocation3], %s553
        %s555 = sand.u32 %s182, 1
        %s556 = scalar_lea.sflag [#allocation6], %s555
        %s557 = sand.u32 %s182, 1
        %s558 = smul.addr %s557, 2
        %s559 = scalar_lea.vmem [#allocation5], %s558
        // Predicated region
        $region49: #{tpu_custom_call.1} parent=39 // pred_check
          %p560 = pneg %p166
        $region50: #{tpu_custom_call.1} parent=39 // pred_check_branch
          %562 = sbr.rel (%p560) target = $region52
        $region51: #{tpu_custom_call.1} parent=39 // pred_region
          %564 = vsyncadd %s552, 0
          %s565 = scalar_lea.hbm %s5, %s28
          %s567 = sshll.u32 %s554, 4
          %s568 = int_to_ptr.vmem [resolvable:$true] %s567
          %s569 = sshll.u32 %s565, 4
          %s570 = int_to_ptr.hbm [resolvable:$true] %s569
          %572 = dma.vmem_to_hbm [thread:$0]  %s568, 16, %s570, %s552
        $region52: #{tpu_custom_call.1} parent=39 // pred_fallthru
          _
        // Predicated region
        $region53: #{tpu_custom_call.1} parent=39 // pred_check
          %p573 = pneg %p192
        $region54: #{tpu_custom_call.1} parent=39 // pred_check_branch
          %575 = sbr.rel (%p573) target = $region56
        $region55: #{tpu_custom_call.1} parent=39 // pred_region
          %577 = vsyncadd %s556, 0
          %s578 = smul.addr %s28, 2
          %s579 = scalar_lea.hbm %s6, %s578
          %s581 = sshll.u32 %s559, 4
          %s582 = int_to_ptr.vmem [resolvable:$true] %s581
          %s583 = sshll.u32 %s579, 4
          %s584 = int_to_ptr.hbm [resolvable:$true] %s583
          %586 = dma.vmem_to_hbm [thread:$0]  %s582, 32, %s584, %s556
        $region56: #{tpu_custom_call.1} parent=39 // pred_fallthru
          _
      $region40: #{tpu_custom_call.1} parent=5 // pred_fallthru
        _
      %p587 = scmp.le.s32.totalorder 2, %s19
      // Predicated region
      $region57: #{tpu_custom_call.1} parent=5 // pred_check
        %p588 = pneg %p587
      $region58: #{tpu_custom_call.1} parent=5 // pred_check_branch
        %590 = sbr.rel (%p588) target = $region60
      $region59: #{tpu_custom_call.1} parent=5 // pred_region
        %s591 = ssub.s32 %s19, 2
        // Predicated region
        $region61: #{tpu_custom_call.1} parent=59 // pred_check
          %p592 = pneg %p172
        $region62: #{tpu_custom_call.1} parent=59 // pred_check_branch
          %594 = sbr.rel (%p592) target = $region64
        $region63: #{tpu_custom_call.1} parent=59 // pred_region
          %s595 = sand.u32 %s157, 1
          %s596 = scalar_lea.sflag [#allocation4], %s595
          %s597 = sand.u32 %s157, 1
          %s598 = scalar_lea.vmem [#allocation3], %s597
          %600 = dma.done %s596, 16
        $region64: #{tpu_custom_call.1} parent=59 // pred_fallthru
          _
        // Predicated region
        $region65: #{tpu_custom_call.1} parent=59 // pred_check
          %p601 = pneg %p198
        $region66: #{tpu_custom_call.1} parent=59 // pred_check_branch
          %603 = sbr.rel (%p601) target = $region68
        $region67: #{tpu_custom_call.1} parent=59 // pred_region
          %s604 = sand.u32 %s183, 1
          %s605 = scalar_lea.sflag [#allocation6], %s604
          %s606 = sand.u32 %s183, 1
          %s607 = smul.addr %s606, 2
          %s608 = scalar_lea.vmem [#allocation5], %s607
          %610 = dma.done %s605, 32
        $region68: #{tpu_custom_call.1} parent=59 // pred_fallthru
          _
      $region60: #{tpu_custom_call.1} parent=5 // pred_fallthru
        _
    $region6: #{tpu_custom_call.1} parent=1 // loop_footer
      %s23 = sadd.s32 1, %s19
    $region7: #{tpu_custom_call.1} parent=1 // loop_footer_branch
      %18 = sbr.rel target = $region3
    $region8: #{tpu_custom_call.1} parent=1 // loop_exit
      _
    %611 = vsyncpa [#allocation4], 1
    %s612 = scalar_lea.sflag [#allocation4], 1
    %613 = vsyncpa %s612, 1
    %614 = vsyncpa [#allocation6], 1
    %s615 = scalar_lea.sflag [#allocation6], 1
    %616 = vsyncpa %s615, 1

</llo_original>
